<compile_context>
chip_gen: v6e
topology: v6e:2x2x1
jax: 0.10.0
libtpu: 0.0.40
codegen_flags: <defaults>
</compile_context>

<pallas_src>
import functools

import jax
import jax.numpy as jnp
from jax import lax
from jax.experimental import pallas as pl
from jax.experimental.pallas import tpu as pltpu


def _round_up(x, m):
    return ((x + m - 1) // m) * m


def _sublane_multiple(dtype):
    itemsize = jnp.dtype(dtype).itemsize
    return {4: 8, 2: 16, 1: 32}.get(itemsize, 8)


def _vmem_capacity_bytes():
    try:
        cap = int(pltpu.get_tpu_info().vmem_capacity_bytes)
        if cap > 0:
            return cap
    except Exception:
        pass
    return 64 * 1024 * 1024  # conservative (v7x per-TC)


def _footprint_bytes(tm, tn, D, x_itemsize, out_itemsize, mxu_itemsize):
    # Double-buffered pipelined operands + the (worst case) persistent scratch.
    f = 2 * tm * D * x_itemsize          # x tile
    f += 2 * D * 4                       # feat_mean (1, D) f32
    f += 2 * D * tn * mxu_itemsize       # centroid tile (D, tn)
    f += 2 * tn * 4                      # nbb1 (1, tn)
    f += 2 * tm * tn * out_itemsize      # out tile
    f += tm * D * mxu_itemsize           # normalized-x scratch
    return f


def _knn_l2_kernel(x_ref, mean_ref, cent_ref, nbb1_ref, out_ref, *scratch,
                   persist_norm, mxu_dtype):
    # x_ref:    (tm, D)   raw input tile (caller dtype)
    # mean_ref: (1, D)    feature mean, f32
    # cent_ref: (D, tn)   pre-transposed centroid tile (mxu_dtype)
    # nbb1_ref: (1, tn)   precomputed -(1 + ||c||^2), f32
    # out_ref:  (tm, tn)  logits tile
    # scratch:  optionally one (tm, D) mxu_dtype VMEM buffer holding the
    #           centered + l2-normalized x tile, persistent across the
    #           (arbitrary) centroid grid axis.

    def _normalized():
        xv = x_ref[...].astype(jnp.float32)
        a = xv - mean_ref[...]                                    # center
        inv_norm = lax.rsqrt(jnp.sum(a * a, axis=1, keepdims=True))
        return (a * inv_norm).astype(mxu_dtype)                   # l2-normalize

    if persist_norm:
        a_scratch, = scratch

        @pl.when(pl.program_id(1) == 0)
        def _():
            a_scratch[...] = _normalized()

        a = a_scratch[...]
    else:
        a = _normalized()

    b = cent_ref[...]                                             # (D, tn)
    # bf16 x bf16 -> f32 on the MXU; RHS contraction already on sublanes.
    ab = jnp.dot(a, b, preferred_element_type=jnp.float32)        # (tm, tn)

    # logit = 2*ab - (1 + ||c||^2); ||a||^2 == 1 after normalization.
    out_ref[...] = (2.0 * ab + nbb1_ref[...]).astype(out_ref.dtype)


def knn_classifier_forward(x, centroids, feat_mean, *,
                           tm=512, tn=512,
                           use_bf16_mxu=True,
                           out_dtype=jnp.float32):
    """x: (N, D), centroids: (C, D), feat_mean: (D,) -> (logit (N, C), None)."""
    N, D = x.shape
    C, Dc = centroids.shape
    assert D == Dc

    mxu_dtype = jnp.bfloat16 if use_bf16_mxu else jnp.float32
    x_itemsize = jnp.dtype(x.dtype).itemsize
    out_itemsize = jnp.dtype(out_dtype).itemsize
    mxu_itemsize = jnp.dtype(mxu_dtype).itemsize

    # Dtype-aware sublane multiple for the row-tile (covers x tile, output
    # tile and the bf16 normalized-x scratch).
    sub_req = max(_sublane_multiple(x.dtype),
                  _sublane_multiple(out_dtype),
                  _sublane_multiple(mxu_dtype))

    tm_eff = min(_round_up(tm, sub_req), _round_up(N, sub_req))
    cp128 = _round_up(C, 128)
    tn_eff = min(_round_up(tn, 128), cp128)

    # --- VMEM budgeting (generation-aware: 64 MiB v7x, 128 MiB v6e/v5e). ---
    vmem_cap = _vmem_capacity_bytes()
    budget = int(0.75 * vmem_cap)
    while _footprint_bytes(tm_eff, tn_eff, D, x_itemsize, out_itemsize,
                           mxu_itemsize) > budget:
        if tn_eff > 128:
            tn_eff = _round_up(max(128, tn_eff // 2), 128)
        elif tm_eff > sub_req:
            tm_eff = _round_up(max(sub_req, tm_eff // 2), sub_req)
        else:
            # TODO(synk): split D with an f32 accumulator axis for huge D.
            break

    if tn_eff >= cp128:
        tn_eff = cp128            # centroids fully VMEM-resident: streamed once
    Np = _round_up(N, tm_eff)
    Cp = _round_up(C, tn_eff)
    num_i = Np // tm_eff
    num_j = Cp // tn_eff

    need = _footprint_bytes(tm_eff, tn_eff, D, x_itemsize, out_itemsize,
                            mxu_itemsize)
    vmem_limit = int(min(int(0.9 * vmem_cap),
                         max(int(need * 1.25) + (4 << 20), 32 << 20)))
    vmem_limit = max(vmem_limit, need + (2 << 20))

    # Persist the normalized-x tile across the centroid axis only when the row
    # axis can still feed both TensorCores (v7x); otherwise recompute the
    # (cheap, O(tm*D)) normalization per step and keep both axes parallel.
    persist_norm = (num_j > 1) and (num_i > 1)

    # --- Host-side preprocessing (pads only materialize when ragged; the
    #     centroid cast + transpose + pad is a single fused XLA pass). ---
    x_p = x if Np == N else jnp.pad(x, ((0, Np - N), (0, 0)))

    cent_f32 = centroids.astype(jnp.float32)
    nbb1 = -(1.0 + jnp.sum(cent_f32 * cent_f32, axis=1)).reshape(1, C)
    if Cp != C:
        nbb1 = jnp.pad(nbb1, ((0, 0), (0, Cp - C)))

    cent_t = centroids.astype(mxu_dtype).T                       # (D, C)
    if Cp != C:
        cent_t = jnp.pad(cent_t, ((0, 0), (0, Cp - C)))          # (D, Cp)

    mean2d = feat_mean.reshape(1, D).astype(jnp.float32)

    grid = (num_i, num_j)
    scratch_shapes = ([pltpu.VMEM((tm_eff, D), mxu_dtype)]
                      if persist_norm else [])
    dims = ("parallel", "arbitrary") if persist_norm else ("parallel", "parallel")

    kernel = functools.partial(_knn_l2_kernel,
                               persist_norm=persist_norm,
                               mxu_dtype=mxu_dtype)

    logit = pl.pallas_call(
        kernel,
        out_shape=jax.ShapeDtypeStruct((Np, Cp), out_dtype),
        grid_spec=pltpu.PrefetchScalarGridSpec(
            num_scalar_prefetch=0,
            grid=grid,
            in_specs=[
                pl.BlockSpec((tm_eff, D), lambda i, j: (i, 0)),    # x tile
                pl.BlockSpec((1, D), lambda i, j: (0, 0)),         # feat_mean
                pl.BlockSpec((D, tn_eff), lambda i, j: (0, j)),    # centroids^T
                pl.BlockSpec((1, tn_eff), lambda i, j: (0, j)),    # -(1+||c||^2)
            ],
            out_specs=pl.BlockSpec((tm_eff, tn_eff), lambda i, j: (i, j)),
            scratch_shapes=scratch_shapes,
        ),
        compiler_params=pltpu.CompilerParams(
            dimension_semantics=dims,
            vmem_limit_bytes=vmem_limit),
    )(x_p, mean2d, cent_t, nbb1)

    return logit[:N, :C], None


def _reference_forward(x, centroids, feat_mean):
    a = x - feat_mean[None, :]
    a = a / jnp.linalg.norm(a, axis=1, keepdims=True)
    ab = a @ centroids.T
    aa = jnp.sum(a * a, axis=1, keepdims=True)
    bb = jnp.sum(centroids * centroids, axis=1, keepdims=True)
    return -(aa + bb.T - 2.0 * ab)


if __name__ == "__main__":
    # Small shapes consistent with the module: feat_dim=128, num_classes=256, batch=8
    N, D, C = 8, 128, 256
    key = jax.random.PRNGKey(0)
    kx, kc, km = jax.random.split(key, 3)

    x = jax.random.normal(kx, (N, D), dtype=jnp.float32)
    centroids = jax.random.normal(kc, (C, D), dtype=jnp.float32)  # ~ torch.randn(num_classes, feat_dim)
    feat_mean = jax.random.normal(km, (D,), dtype=jnp.float32)    # ~ torch.randn(feat_dim)

    ref = _reference_forward(x, centroids, feat_mean)

    # Default (bf16 MXU) path: looser tolerance (bf16 operand rounding).
    logit, _ = knn_classifier_forward(x, centroids, feat_mean)
    logit = jax.block_until_ready(logit)
    assert logit.shape == (N, C)
    assert jnp.allclose(logit, ref, atol=0.5, rtol=1e-2)

    # Full-precision path: tight tolerance.
    logit32, _ = knn_classifier_forward(x, centroids, feat_mean,
                                        use_bf16_mxu=False)
    logit32 = jax.block_until_ready(logit32)
    assert logit32.shape == (N, C)
    assert jnp.allclose(logit32, ref, atol=1e-3, rtol=1e-3)

    print("KERNEL_OK")
</pallas_src>

<mosaic_0001>
module attributes {stable_mosaic.version = 11 : i64} {
  func.func @_knn_l2_kernel(%arg0: i32, %arg1: i32, %arg2: memref<16x128xf32, #tpu.memory_space<vmem>>, %arg3: memref<1x128xf32, #tpu.memory_space<vmem>>, %arg4: memref<128x256xbf16, #tpu.memory_space<vmem>>, %arg5: memref<1x256xf32, #tpu.memory_space<vmem>>, %arg6: memref<16x256xf32, #tpu.memory_space<vmem>>) attributes {dimension_semantics = [#tpu.dimension_semantics<parallel>, #tpu.dimension_semantics<parallel>], iteration_bounds = array<i64: 1, 1>, scalar_prefetch = 0 : i64, scratch_operands = 0 : i64, tpu.core_type = #tpu.core_type<tc>, window_params = [{transform_indices = @transform_0, window_bounds = array<i64: 16, 128>}, {pipeline_mode = #tpu.pipeline_mode<synchronous>, transform_indices = @transform_1, window_bounds = array<i64: 1, 128>}, {transform_indices = @transform_2, window_bounds = array<i64: 128, 256>}, {transform_indices = @transform_3, window_bounds = array<i64: 1, 256>}, {transform_indices = @transform_4, window_bounds = array<i64: 16, 256>}]} {
    %c0 = arith.constant 0 : index
    %c0_0 = arith.constant 0 : index
    %0 = vector.load %arg2[%c0, %c0_0] : memref<16x128xf32, #tpu.memory_space<vmem>>, vector<16x128xf32>
    %c0_1 = arith.constant 0 : index
    %c0_2 = arith.constant 0 : index
    %1 = vector.load %arg3[%c0_1, %c0_2] : memref<1x128xf32, #tpu.memory_space<vmem>>, vector<1x128xf32>
    %2 = vector.broadcast %1 : vector<1x128xf32> to vector<16x128xf32>
    %3 = arith.subf %0, %2 : vector<16x128xf32>
    %4 = arith.mulf %3, %3 : vector<16x128xf32>
    %cst = arith.constant dense<0.000000e+00> : vector<16xf32>
    %5 = vector.multi_reduction <add>, %4, %cst [1] : vector<16x128xf32> to vector<16xf32>
    %6 = vector.shape_cast %5 : vector<16xf32> to vector<16x1xf32>
    %7 = math.rsqrt %6 : vector<16x1xf32>
    %8 = vector.broadcast %7 : vector<16x1xf32> to vector<16x128xf32>
    %9 = arith.mulf %3, %8 : vector<16x128xf32>
    %10 = arith.truncf %9 : vector<16x128xf32> to vector<16x128xbf16>
    %c0_3 = arith.constant 0 : index
    %c0_4 = arith.constant 0 : index
    %11 = vector.load %arg4[%c0_3, %c0_4] : memref<128x256xbf16, #tpu.memory_space<vmem>>, vector<128x256xbf16>
    %cst_5 = arith.constant dense<0.000000e+00> : vector<16x256xf32>
    %12 = tpu.matmul %10, %11, %cst_5 {dimension_numbers = #tpu.dot_dimension_numbers<[1], [0], [0], [1], [0, 0, 1, 1], [], []>} : vector<16x128xbf16>, vector<128x256xbf16>, vector<16x256xf32> -> vector<16x256xf32>
    %cst_6 = arith.constant 2.000000e+00 : f32
    %13 = vector.broadcast %cst_6 : f32 to vector<16x256xf32>
    %14 = arith.mulf %13, %12 : vector<16x256xf32>
    %c0_7 = arith.constant 0 : index
    %c0_8 = arith.constant 0 : index
    %15 = vector.load %arg5[%c0_7, %c0_8] : memref<1x256xf32, #tpu.memory_space<vmem>>, vector<1x256xf32>
    %16 = vector.broadcast %15 : vector<1x256xf32> to vector<16x256xf32>
    %17 = arith.addf %14, %16 : vector<16x256xf32>
    %c0_9 = arith.constant 0 : index
    %c0_10 = arith.constant 0 : index
    %18 = vector.load %arg6[%c0_9, %c0_10] : memref<16x256xf32, #tpu.memory_space<vmem>>, vector<16x256xf32>
    tpu.vector_store %arg6[%c0_9, %c0_10], %17 {strides = array<i32>} : memref<16x256xf32, #tpu.memory_space<vmem>>, vector<16x256xf32>,
    return
  }
  func.func @transform_0(%arg0: i32, %arg1: i32) -> (i32, i32) {
    %c0_i32 = arith.constant 0 : i32
    %c0_i32_0 = arith.constant 0 : i32
    return %arg0, %c0_i32 : i32, i32
  }
  func.func @transform_1(%arg0: i32, %arg1: i32) -> (i32, i32) {
    %c0_i32 = arith.constant 0 : i32
    %c0_i32_0 = arith.constant 0 : i32
    %c0_i32_1 = arith.constant 0 : i32
    return %c0_i32, %c0_i32_0 : i32, i32
  }
  func.func @transform_2(%arg0: i32, %arg1: i32) -> (i32, i32) {
    %c0_i32 = arith.constant 0 : i32
    %c0_i32_0 = arith.constant 0 : i32
    return %c0_i32, %arg1 : i32, i32
  }
  func.func @transform_3(%arg0: i32, %arg1: i32) -> (i32, i32) {
    %c0_i32 = arith.constant 0 : i32
    %c0_i32_0 = arith.constant 0 : i32
    return %c0_i32, %arg1 : i32, i32
  }
  func.func @transform_4(%arg0: i32, %arg1: i32) -> (i32, i32) {
    %c0_i32 = arith.constant 0 : i32
    return %arg0, %arg1 : i32, i32
  }
}

</mosaic_0001>

<llo_original>
// kernel: tpu_custom_call.1
$region0: #{tpu_custom_call.1}
  #allocation0 [shape = 'u32[]', space=smem, size = 0x4, offset = 0x4, fixed_abs, tag = 'smem constant byte address 0x4 - core index']
  #allocation1 [shape = 'u32[144,128]{1,0:T(1,128)}', space=vmem, size = 0x12000, scoped, tag = 'internal scratch']
  %s0 = inlined_call_operand.hbm [shape: f32[16,128], index: 0, kind: input, shape index: {}]
  %s1 = inlined_call_operand.vmem [shape: f32[1,128], index: 1, kind: input, shape index: {}]
  %s2 = inlined_call_operand.hbm [shape: bf16[128,256], index: 2, kind: input, shape index: {}]
  %s3 = inlined_call_operand.vmem [shape: f32[1,256], index: 3, kind: input, shape index: {}]
  %s4 = inlined_call_operand.hbm [shape: f32[16,256], index: 4, kind: output, shape index: {}]
  %s5 = sld [smem:[#allocation0]]
  $region34: #{tpu_custom_call.1} parent=0
    _
  %s7 = ssub.s32 1, %s5
  %s8 = scalar_select 0, %s7, %s5
  $region1: #{tpu_custom_call.1} parent=0
    #allocation2 [shape = 'u8[8192]{0}', space=vmem, size = 0x2000, scoped, tag = 'input window, operand 0, single buffered']
    #allocation3 [shape = 's32[1]{0}', space=sflag, size = 0x4, scoped, tag = 'scoped memory for tpu_custom_call.1']
    #allocation4 [shape = 's32[1]{0}', space=sflag, size = 0x4, scoped, tag = 'scoped memory for tpu_custom_call.1']
    #allocation5 [shape = 'u8[65536]{0}', space=vmem, size = 0x10000, scoped, tag = 'input window, operand 2, single buffered']
    #allocation6 [shape = 's32[1]{0}', space=sflag, size = 0x4, scoped, tag = 'scoped memory for tpu_custom_call.1']
    #allocation7 [shape = 'u8[16384]{0}', space=vmem, size = 0x4000, scoped, tag = 'output window, operand 0, single buffered']
    %9 = vsyncpa [#allocation3], 0
    %10 = vsyncpa [#allocation6], 0
    %11 = vsyncpa [#allocation4], 0
    // Predicated region
    $region2: #{tpu_custom_call.1} parent=1 // pred_check
      _
    $region3: #{tpu_custom_call.1} parent=1 // pred_check_branch
      %13 = sbr.rel (0) target = $region5
    $region4: #{tpu_custom_call.1} parent=1 // pred_region
      %s15 = ssub.s32 256, 256
      %16 = vsyncadd [#allocation3], %s15
      %s17 = sshll.u32 [#allocation2], 4
      %s18 = int_to_ptr.vmem [resolvable:$true] %s17
      %23 = dma.hbm_to_vmem [thread:$0]  %s0, 256, %s18, [#allocation3], 128, 128, 8
    $region5: #{tpu_custom_call.1} parent=1 // pred_fallthru
      _
    // Predicated region
    $region6: #{tpu_custom_call.1} parent=1 // pred_check
      _
    $region7: #{tpu_custom_call.1} parent=1 // pred_check_branch
      %25 = sbr.rel (0) target = $region9
    $region8: #{tpu_custom_call.1} parent=1 // pred_region
      _
    $region9: #{tpu_custom_call.1} parent=1 // pred_fallthru
      _
    // Predicated region
    $region10: #{tpu_custom_call.1} parent=1 // pred_check
      _
    $region11: #{tpu_custom_call.1} parent=1 // pred_check_branch
      %27 = sbr.rel (0) target = $region13
    $region12: #{tpu_custom_call.1} parent=1 // pred_region
      %s29 = ssub.s32 2048, 2048
      %30 = vsyncadd [#allocation6], %s29
      %s31 = sshll.u32 [#allocation5], 4
      %s32 = int_to_ptr.vmem [resolvable:$true] %s31
      %37 = dma.hbm_to_vmem [thread:$0]  %s2, 2048, %s32, [#allocation6], 128, 128, 8
    $region13: #{tpu_custom_call.1} parent=1 // pred_fallthru
      _
    // Predicated region
    $region14: #{tpu_custom_call.1} parent=1 // pred_check
      _
    $region15: #{tpu_custom_call.1} parent=1 // pred_check_branch
      %39 = sbr.rel (0) target = $region17
    $region16: #{tpu_custom_call.1} parent=1 // pred_region
      _
    $region17: #{tpu_custom_call.1} parent=1 // pred_fallthru
      _
    // Predicated region
    $region18: #{tpu_custom_call.1} parent=1 // pred_check
      _
    $region19: #{tpu_custom_call.1} parent=1 // pred_check_branch
      %41 = sbr.rel (0) target = $region21
    $region20: #{tpu_custom_call.1} parent=1 // pred_region
      %42 = dma.done [#allocation3], 256
    $region21: #{tpu_custom_call.1} parent=1 // pred_fallthru
      _
    // Predicated region
    $region22: #{tpu_custom_call.1} parent=1 // pred_check
      _
    $region23: #{tpu_custom_call.1} parent=1 // pred_check_branch
      %44 = sbr.rel (0) target = $region25
    $region24: #{tpu_custom_call.1} parent=1 // pred_region
      %45 = dma.done [#allocation6], 2048
    $region25: #{tpu_custom_call.1} parent=1 // pred_fallthru
      _
    %v47 = vld [vmem:[#allocation2] sm:$0xff]
    %v48 = vld [vmem:[#allocation2 + $0x8] sm:$0xff]
    %v49 = vld [vmem:[%s1] sm:$0x1]
    %v51 = vlaneseq
    %v52 = vshrl.u32 %v51, 7
    %v53 = vsub.s32 0, %v52
    %v54 = vrot.slane %v49, %v53
    %v56 = vsub.f32 %v47, %v54
    %v57 = vsub.f32 %v48, %v54
    %v58 = vmul.f32 %v56, %v56
    %v59 = vmul.f32 %v57, %v57
    %60 = vadd.xlane.f32.xlu0 %v58
    %v61 = vpop.xlane.xlu0 %60
    %62 = vadd.xlane.f32.xlu0 %v59
    %v63 = vpop.xlane.xlu0 %62
    %v64 = vrsqrt.pop %v61
    %v65 = vrsqrt.pop %v63
    %v66 = vmul.f32 %v56, %v64
    %v67 = vmul.f32 %v57, %v65
    %v68 = vpack.c.bf16 %v67, %v66
    %v69 = vld [vmem:[#allocation5] sm:$0xff]
    %v70 = vld [vmem:[#allocation5 + $0x8] sm:$0xff]
    %v71 = vld [vmem:[#allocation5 + $0x10] sm:$0xff]
    %v72 = vld [vmem:[#allocation5 + $0x18] sm:$0xff]
    %v73 = vld [vmem:[#allocation5 + $0x20] sm:$0xff]
    %v74 = vld [vmem:[#allocation5 + $0x28] sm:$0xff]
    %v75 = vld [vmem:[#allocation5 + $0x30] sm:$0xff]
    %v76 = vld [vmem:[#allocation5 + $0x38] sm:$0xff]
    %v77 = vld [vmem:[#allocation5 + $0x40] sm:$0xff]
    %v78 = vld [vmem:[#allocation5 + $0x48] sm:$0xff]
    %v79 = vld [vmem:[#allocation5 + $0x50] sm:$0xff]
    %v80 = vld [vmem:[#allocation5 + $0x58] sm:$0xff]
    %v81 = vld [vmem:[#allocation5 + $0x60] sm:$0xff]
    %v82 = vld [vmem:[#allocation5 + $0x68] sm:$0xff]
    %v83 = vld [vmem:[#allocation5 + $0x70] sm:$0xff]
    %v84 = vld [vmem:[#allocation5 + $0x78] sm:$0xff]
    %v101 = vunpack.c.l.b16 %v69
    %v102 = vunpack.c.h.b16 %v69
    %v103 = vunpack.c.l.b16 %v70
    %v104 = vunpack.c.h.b16 %v70
    %v105 = vunpack.c.l.b16 %v71
    %v106 = vunpack.c.h.b16 %v71
    %v107 = vunpack.c.l.b16 %v72
    %v108 = vunpack.c.h.b16 %v72
    %v109 = vunpack.c.l.b16 %v73
    %v110 = vunpack.c.h.b16 %v73
    %v111 = vunpack.c.l.b16 %v74
    %v112 = vunpack.c.h.b16 %v74
    %v113 = vunpack.c.l.b16 %v75
    %v114 = vunpack.c.h.b16 %v75
    %v115 = vunpack.c.l.b16 %v76
    %v116 = vunpack.c.h.b16 %v76
    %v117 = vunpack.c.l.b16 %v77
    %v118 = vunpack.c.h.b16 %v77
    %v119 = vunpack.c.l.b16 %v78
    %v120 = vunpack.c.h.b16 %v78
    %v121 = vunpack.c.l.b16 %v79
    %v122 = vunpack.c.h.b16 %v79
    %v123 = vunpack.c.l.b16 %v80
    %v124 = vunpack.c.h.b16 %v80
    %v125 = vunpack.c.l.b16 %v81
    %v126 = vunpack.c.h.b16 %v81
    %v127 = vunpack.c.l.b16 %v82
    %v128 = vunpack.c.h.b16 %v82
    %v129 = vunpack.c.l.b16 %v83
    %v130 = vunpack.c.h.b16 %v83
    %v131 = vunpack.c.l.b16 %v84
    %v132 = vunpack.c.h.b16 %v84
    %v133 = vpack.c.b16 %v103, %v101
    %v134 = vpack.c.b16 %v104, %v102
    %v135 = vpack.c.b16 %v107, %v105
    %v136 = vpack.c.b16 %v108, %v106
    %v137 = vpack.c.b16 %v111, %v109
    %v138 = vpack.c.b16 %v112, %v110
    %v139 = vpack.c.b16 %v115, %v113
    %v140 = vpack.c.b16 %v116, %v114
    %v141 = vpack.c.b16 %v119, %v117
    %v142 = vpack.c.b16 %v120, %v118
    %v143 = vpack.c.b16 %v123, %v121
    %v144 = vpack.c.b16 %v124, %v122
    %v145 = vpack.c.b16 %v127, %v125
    %v146 = vpack.c.b16 %v128, %v126
    %v147 = vpack.c.b16 %v131, %v129
    %v148 = vpack.c.b16 %v132, %v130
    %165 = vmatprep.subr.bf16.mxu0 %v148
    %166 = vmatpush1.bf16.msra.mxu0 %v147
    %167 = vmatprep.subr.bf16.mxu0 %v146
    %168 = vmatpush1.bf16.msra.mxu0 %v145
    %169 = vmatprep.subr.bf16.mxu0 %v144
    %170 = vmatpush1.bf16.msra.mxu0 %v143
    %171 = vmatprep.subr.bf16.mxu0 %v142
    %172 = vmatpush1.bf16.msra.mxu0 %v141
    %173 = vmatprep.subr.bf16.mxu0 %v140
    %174 = vmatpush1.bf16.msra.mxu0 %v139
    %175 = vmatprep.subr.bf16.mxu0 %v138
    %176 = vmatpush1.bf16.msra.mxu0 %v137
    %177 = vmatprep.subr.bf16.mxu0 %v136
    %178 = vmatpush1.bf16.msra.mxu0 %v135
    %179 = vmatprep.subr.bf16.mxu0 %v134
    %180 = vmatpush1.bf16.msra.mxu0 %v133
    %181 = vmatprep.subr.bf16.mxu0 0
    %182 = vmatpush2.bf16.msra.mxu0 0
    %183 = vmatprep.subr.bf16.mxu0 0
    %184 = vmatpush2.bf16.msra.mxu0 0
    %185 = vmatprep.subr.bf16.mxu0 0
    %186 = vmatpush2.bf16.msra.mxu0 0
    %187 = vmatprep.subr.bf16.mxu0 0
    %188 = vmatpush2.bf16.msra.mxu0 0
    %189 = vmatprep.subr.bf16.mxu0 0
    %190 = vmatpush2.bf16.msra.mxu0 0
    %191 = vmatprep.subr.bf16.mxu0 0
    %192 = vmatpush2.bf16.msra.mxu0 0
    %193 = vmatprep.subr.bf16.mxu0 0
    %194 = vmatpush2.bf16.msra.mxu0 0
    %195 = vmatprep.subr.bf16.mxu0 0
    %196 = vmatpush2.bf16.msra.mxu0 0
    %197 = vmatprep.mubr.bf16.mxu0 0
    %198 = vmatmul.mubr.bf16.gmra.mxu0 %v68
    %v199 = vpop.f32.mrf.mxu0
    %v200 = vadd.f32 0.0, %v199
    %v201 = vpop.f32.mrf.mxu0
    %v202 = vadd.f32 0.0, %v201
    %v203 = vpop.f32.mrf.mxu0
    %v204 = vadd.f32 0.0, %v203
    %v205 = vpop.f32.mrf.mxu0
    %v206 = vadd.f32 0.0, %v205
    %207 = vdwg.mxu0
    %v208 = vmul.f32 %v200, 2.0
    %v209 = vmul.f32 %v202, 2.0
    %v210 = vmul.f32 %v204, 2.0
    %v211 = vmul.f32 %v206, 2.0
    %v212 = vld [vmem:[%s3] sm:$0x3]
    %v214 = vlaneseq
    %v215 = vshrl.u32 %v214, 7
    %v216 = vsub.s32 0, %v215
    %v217 = vrot.slane %v212, %v216
    %v218 = vlaneseq
    %v219 = vshrl.u32 %v218, 7
    %v220 = vsub.s32 1, %v219
    %v221 = vrot.slane %v212, %v220
    %v224 = vadd.f32 %v208, %v217
    %v225 = vadd.f32 %v209, %v221
    %v226 = vadd.f32 %v210, %v217
    %v227 = vadd.f32 %v211, %v221
    %228 = vst [vmem:[#allocation7] sm:$0xff] %v224
    %229 = vst [vmem:[#allocation7 + $0x8] sm:$0xff] %v225
    %230 = vst [vmem:[#allocation7 + $0x10] sm:$0xff] %v226
    %231 = vst [vmem:[#allocation7 + $0x18] sm:$0xff] %v227
    // Predicated region
    $region26: #{tpu_custom_call.1} parent=1 // pred_check
      _
    $region27: #{tpu_custom_call.1} parent=1 // pred_check_branch
      %233 = sbr.rel (0) target = $region29
    $region28: #{tpu_custom_call.1} parent=1 // pred_region
      %s235 = ssub.s32 512, 512
      %236 = vsyncadd [#allocation4], %s235
      %s237 = sshll.u32 [#allocation7], 4
      %s238 = int_to_ptr.vmem [resolvable:$true] %s237
      %243 = dma.vmem_to_hbm [thread:$0]  %s238, 512, %s4, [#allocation4], 256, 256, 16
    $region29: #{tpu_custom_call.1} parent=1 // pred_fallthru
      _
    // Predicated region
    $region30: #{tpu_custom_call.1} parent=1 // pred_check
      _
    $region31: #{tpu_custom_call.1} parent=1 // pred_check_branch
      %245 = sbr.rel (0) target = $region33
    $region32: #{tpu_custom_call.1} parent=1 // pred_region
      %246 = dma.done [#allocation4], 512
    $region33: #{tpu_custom_call.1} parent=1 // pred_fallthru
      _
    %247 = vsyncpa [#allocation3], 1
    %248 = vsyncpa [#allocation6], 1
    %249 = vsyncpa [#allocation4], 1

</llo_original>
